<compile_context>
chip_gen: v6e
topology: v6e:2x2x1
jax: 0.10.0
libtpu: 0.0.40
codegen_flags: <defaults>
</compile_context>

<pallas_src>
import jax
import jax.numpy as jnp
from jax.experimental import pallas as pl
from jax.experimental.pallas import tpu as pltpu

_LANES = 128
_SUBLANES = 8
# Golden-ratio constant (0x9E3779B9) as signed int32: decorrelates per-tile
# PRNG seeds derived from adjacent absolute row offsets.
_SEED_MIX = jnp.int32(-1640531527)


def _make_prng_kernel(tile_rows):
    def kernel(seed_ref, x_ref, o_ref):
        # Seed from the absolute starting row of this tile (not the raw grid
        # index), hashed so adjacent tiles get well-separated streams.
        row0 = pl.program_id(0) * tile_rows
        pltpu.prng_seed(seed_ref[0] + _SEED_MIX * row0)
        noise = pltpu.stateful_normal(o_ref.shape, jnp.float32)
        # x_ref is (tile_rows, 1): broadcast along the lane (E) axis on the VPU.
        o_ref[...] = (noise * x_ref[...]).astype(o_ref.dtype)
    return kernel


def _mul_kernel(x_ref, n_ref, o_ref):
    # Portable path: noise supplied as an input, kernel is the broadcast multiply.
    o_ref[...] = (n_ref[...] * x_ref[...]).astype(o_ref.dtype)


def _pick_tile_rows(rows, embed_dim):
    """Rows per grid step.

    VMEM accounting (per perf review): each grid step holds
        2 * tile_rows * E_pad * 4  bytes   -- double-buffered output tile
      + 2 * tile_rows * 128   * 4  bytes   -- double-buffered (tile_rows, 1)
                                              scale block, lane-PADDED to 128
    i.e. the scale block costs as much VMEM as the output tile when E == 128.
    Keep the total under ~16 MiB, well inside the 32 MiB scoped-VMEM limit we
    request explicitly (v5e/v6e: 128 MiB physical, v7x: 64 MiB physical).
    """
    e_pad = -(-embed_dim // _LANES) * _LANES
    total_budget = 16 * 1024 * 1024
    bytes_per_row = 2 * 4 * (e_pad + _LANES)
    cap = max(_SUBLANES, (total_budget // bytes_per_row) // _SUBLANES * _SUBLANES)

    if rows < 2 * _SUBLANES:
        # Too small to split into two (8, .)-aligned tiles: single full-array
        # block (legal because the block dims equal the array dims).
        return rows

    # At least 2 tiles so the "parallel" row axis can shard across v7x's two
    # TensorCores, at most `cap` rows per tile (VMEM budget). Prefer a
    # multiple-of-8 tile_rows that divides rows -> last store never masked.
    n_min = max(2, -(-rows // cap))
    t = max(_SUBLANES, (rows // n_min) // _SUBLANES * _SUBLANES)
    for tile in range(t, 0, -_SUBLANES):
        if rows % tile == 0:
            return tile
    return t  # fallback: last tile is a masked partial store


def embedding_forward(x, embed_dim, seed=0, out_dtype=jnp.float32):
    """Pallas equivalent of Embedding.forward: randn(B, S, E) * x[..., None]."""
    B, S = x.shape
    E = int(embed_dim)
    rows = B * S
    x2 = x.reshape(rows, 1).astype(jnp.float32)

    tile_rows = _pick_tile_rows(rows, E)
    grid = (pl.cdiv(rows, tile_rows),)
    compiler_params = pltpu.CompilerParams(
        dimension_semantics=("parallel",),       # megacore split of the row axis
        vmem_limit_bytes=32 * 1024 * 1024,       # explicit; tiles budgeted to ~16 MiB
    )

    if jax.default_backend() == "tpu":
        seed_arr = jnp.array([seed], dtype=jnp.int32)
        out_flat = pl.pallas_call(
            _make_prng_kernel(tile_rows),
            out_shape=jax.ShapeDtypeStruct((rows, E), out_dtype),
            grid_spec=pltpu.PrefetchScalarGridSpec(
                num_scalar_prefetch=1,  # seed lands in SMEM
                grid=grid,
                in_specs=[pl.BlockSpec((tile_rows, 1), lambda i, s_ref: (i, 0))],
                out_specs=pl.BlockSpec((tile_rows, E), lambda i, s_ref: (i, 0)),
            ),
            compiler_params=compiler_params,
        )(seed_arr, x2)
    else:
        # TPU PRNG primitives (prng_seed / stateful_normal) do not lower off-TPU;
        # generate the Gaussian noise with jax.random, multiply in-kernel.
        noise = jax.random.normal(
            jax.random.PRNGKey(seed), (rows, E), dtype=jnp.float32)
        out_flat = pl.pallas_call(
            _mul_kernel,
            out_shape=jax.ShapeDtypeStruct((rows, E), out_dtype),
            grid=grid,
            in_specs=[pl.BlockSpec((tile_rows, 1), lambda i: (i, 0)),
                      pl.BlockSpec((tile_rows, E), lambda i: (i, 0))],
            out_specs=pl.BlockSpec((tile_rows, E), lambda i: (i, 0)),
            compiler_params=compiler_params,
        )(x2, noise)

    return out_flat.reshape(B, S, E)


if __name__ == "__main__":
    batch = 4
    input_size = 10     # matches `input_size = 10` in the reference script
    embed_dim = 128

    key = jax.random.PRNGKey(0)
    x = jax.random.normal(key, (batch, input_size), dtype=jnp.float32)

    out = jax.block_until_ready(embedding_forward(x, embed_dim, seed=0))
    assert out.shape == (batch, input_size, embed_dim)
    assert out.dtype == jnp.float32

    # Self-consistency: with the same seed the noise is identical, so
    # out(x) must equal out(ones) * x[..., None] exactly.
    base = jax.block_until_ready(
        embedding_forward(jnp.ones_like(x), embed_dim, seed=0))
    expected = base * x[:, :, None]
    assert jnp.allclose(out, expected, rtol=1e-6, atol=1e-6)

    # TODO(synk): output randomness cannot be bit-identical to torch.randn
    # (different PRNG); only distributional / self-consistency checks apply.
    print("KERNEL_OK")
</pallas_src>

<mosaic_0001>
module attributes {stable_mosaic.version = 11 : i64} {
  func.func @_mul_kernel(%arg0: i32, %arg1: memref<8x1xf32, #tpu.memory_space<vmem>>, %arg2: memref<8x128xf32, #tpu.memory_space<vmem>>, %arg3: memref<8x128xf32, #tpu.memory_space<vmem>>) attributes {dimension_semantics = [#tpu.dimension_semantics<parallel>], iteration_bounds = array<i64: 5>, scalar_prefetch = 0 : i64, scratch_operands = 0 : i64, tpu.core_type = #tpu.core_type<tc>, window_params = [{transform_indices = @transform_0, window_bounds = array<i64: 8, 1>}, {transform_indices = @transform_1, window_bounds = array<i64: 8, 128>}, {transform_indices = @transform_2, window_bounds = array<i64: 8, 128>}]} {
    %c0 = arith.constant 0 : index
    %c0_0 = arith.constant 0 : index
    %0 = vector.load %arg2[%c0, %c0_0] : memref<8x128xf32, #tpu.memory_space<vmem>>, vector<8x128xf32>
    %c0_1 = arith.constant 0 : index
    %c0_2 = arith.constant 0 : index
    %1 = vector.load %arg1[%c0_1, %c0_2] : memref<8x1xf32, #tpu.memory_space<vmem>>, vector<8x1xf32>
    %2 = vector.broadcast %1 : vector<8x1xf32> to vector<8x128xf32>
    %3 = arith.mulf %0, %2 : vector<8x128xf32>
    %c0_3 = arith.constant 0 : index
    %c0_4 = arith.constant 0 : index
    %4 = vector.load %arg3[%c0_3, %c0_4] : memref<8x128xf32, #tpu.memory_space<vmem>>, vector<8x128xf32>
    tpu.vector_store %arg3[%c0_3, %c0_4], %3 {strides = array<i32>} : memref<8x128xf32, #tpu.memory_space<vmem>>, vector<8x128xf32>,
    return
  }
  func.func @transform_0(%arg0: i32) -> (i32, i32) {
    %c0_i32 = arith.constant 0 : i32
    %c0_i32_0 = arith.constant 0 : i32
    return %arg0, %c0_i32 : i32, i32
  }
  func.func @transform_1(%arg0: i32) -> (i32, i32) {
    %c0_i32 = arith.constant 0 : i32
    %c0_i32_0 = arith.constant 0 : i32
    return %arg0, %c0_i32 : i32, i32
  }
  func.func @transform_2(%arg0: i32) -> (i32, i32) {
    %c0_i32 = arith.constant 0 : i32
    %c0_i32_0 = arith.constant 0 : i32
    return %arg0, %c0_i32 : i32, i32
  }
}

</mosaic_0001>

<llo_original>
// kernel: tpu_custom_call.1
$region0: #{tpu_custom_call.1}
  #allocation0 [shape = 'u32[]', space=smem, size = 0x4, offset = 0x4, fixed_abs, tag = 'smem constant byte address 0x4 - core index']
  #allocation1 [shape = 'u32[144,128]{1,0:T(1,128)}', space=vmem, size = 0x12000, scoped, tag = 'internal scratch']
  %s0 = inlined_call_operand.vmem [shape: f32[40,1], index: 0, kind: input, shape index: {}]
  %s1 = inlined_call_operand.vmem [shape: f32[40,128], index: 1, kind: input, shape index: {}]
  %s2 = inlined_call_operand.hbm [shape: f32[40,128], index: 2, kind: output, shape index: {}]
  %s3 = sld [smem:[#allocation0]]
  $region41: #{tpu_custom_call.1} parent=0
    _
  %s5 = ssub.s32 1, %s3
  %s6 = scalar_select 0, %s5, %s3
  $region1: #{tpu_custom_call.1} parent=0
    #allocation2 [shape = 'u8[8192]{0}', space=vmem, size = 0x2000, scoped, tag = 'output window, operand 0']
    #allocation3 [shape = 's32[2]{0}', space=sflag, size = 0x8, scoped, tag = 'scoped memory for tpu_custom_call.1']
    %7 = vsyncpa [#allocation3], 0
    %s8 = scalar_lea.sflag [#allocation3], 1
    %9 = vsyncpa %s8, 0
    loop: start=0, step=1, limit=7
    $region2: #{tpu_custom_call.1} parent=1 // loop_pre_header
      _
    $region3: #{tpu_custom_call.1} parent=1 // loop_header
      %s11 = sphi 0, %s15
      %p12 = scmp.ge.s32.totalorder %s11, 7
      %s21 = sphi 0, %s23
      %s24 = sphi 0, %s21
      %s25 = sphi 0, %s24
      %s41 = sphi 0, %s25
      %s47 = sphi 0, %s49
      %s50 = sphi 0, %s47
      %s51 = sphi 0, %s50
      %s67 = sphi 0, %s51
      %s73 = sphi 0, %s75
      %s76 = sphi 0, %s73
      %s77 = sphi 0, %s76
      %s93 = sphi 0, %s77
    $region4: #{tpu_custom_call.1} parent=1 // loop_header_branch
      %14 = sbr.rel (%p12) target = $region8
    $region5: #{tpu_custom_call.1} parent=1 // loop_body
      %s16 = ssub.s32 %s11, 1
      %s17 = ssub.s32 %s11, 2
      %s18 = sadd.s32 %s11, 1
      %s19 = ssub.s32 %s11, %s18
      %p20 = scmp.eq.s32.totalorder %s19, 0
      %s22 = sadd.s32 %s21, 1
      %s23 = scalar_select %p20, %s21, %s22
      %p26 = pneg %p20
      %p27 = scmp.eq.s32.totalorder %s11, 4
      %p28 = por %p26, %p27
      %p29 = scmp.ne.s32.totalorder %s21, %s24
      %p30 = scmp.eq.s32.totalorder %s11, 0
      %p31 = por %p29, %p30
      %p32 = scmp.ne.s32.totalorder %s21, %s24
      %p33 = scmp.eq.s32.totalorder %s16, 4
      %p34 = por %p32, %p33
      %p35 = scmp.ne.s32.totalorder %s24, %s25
      %p36 = scmp.eq.s32.totalorder %s16, 0
      %p37 = por %p35, %p36
      %p38 = scmp.ne.s32.totalorder %s24, %s25
      %p39 = scmp.eq.s32.totalorder %s17, 4
      %p40 = por %p38, %p39
      %p42 = scmp.ne.s32.totalorder %s25, %s41
      %p43 = scmp.eq.s32.totalorder %s17, 0
      %p44 = por %p42, %p43
      %s45 = ssub.s32 %s11, %s18
      %p46 = scmp.eq.s32.totalorder %s45, 0
      %s48 = sadd.s32 %s47, 1
      %s49 = scalar_select %p46, %s47, %s48
      %p52 = pneg %p46
      %p53 = scmp.eq.s32.totalorder %s11, 4
      %p54 = por %p52, %p53
      %p55 = scmp.ne.s32.totalorder %s47, %s50
      %p56 = scmp.eq.s32.totalorder %s11, 0
      %p57 = por %p55, %p56
      %p58 = scmp.ne.s32.totalorder %s47, %s50
      %p59 = scmp.eq.s32.totalorder %s16, 4
      %p60 = por %p58, %p59
      %p61 = scmp.ne.s32.totalorder %s50, %s51
      %p62 = scmp.eq.s32.totalorder %s16, 0
      %p63 = por %p61, %p62
      %p64 = scmp.ne.s32.totalorder %s50, %s51
      %p65 = scmp.eq.s32.totalorder %s17, 4
      %p66 = por %p64, %p65
      %p68 = scmp.ne.s32.totalorder %s51, %s67
      %p69 = scmp.eq.s32.totalorder %s17, 0
      %p70 = por %p68, %p69
      %s71 = ssub.s32 %s11, %s18
      %p72 = scmp.eq.s32.totalorder %s71, 0
      %s74 = sadd.s32 %s73, 1
      %s75 = scalar_select %p72, %s73, %s74
      %p78 = pneg %p72
      %p79 = scmp.eq.s32.totalorder %s11, 4
      %p80 = por %p78, %p79
      %p81 = scmp.ne.s32.totalorder %s73, %s76
      %p82 = scmp.eq.s32.totalorder %s11, 0
      %p83 = por %p81, %p82
      %p84 = scmp.ne.s32.totalorder %s73, %s76
      %p85 = scmp.eq.s32.totalorder %s16, 4
      %p86 = por %p84, %p85
      %p87 = scmp.ne.s32.totalorder %s76, %s77
      %p88 = scmp.eq.s32.totalorder %s16, 0
      %p89 = por %p87, %p88
      %p90 = scmp.ne.s32.totalorder %s76, %s77
      %p91 = scmp.eq.s32.totalorder %s17, 4
      %p92 = por %p90, %p91
      %p94 = scmp.ne.s32.totalorder %s77, %s93
      %p95 = scmp.eq.s32.totalorder %s17, 0
      %p96 = por %p94, %p95
      %p97 = scmp.le.s32.totalorder 1, %s11
      %p98 = scmp.lt.s32.totalorder %s11, 6
      %p99 = pnand %p97, %p98
      %p100 = pneg %p99
      // Predicated region
      $region9: #{tpu_custom_call.1} parent=5 // pred_check
        _
      $region10: #{tpu_custom_call.1} parent=5 // pred_check_branch
        %102 = sbr.rel (%p99) target = $region12
      $region11: #{tpu_custom_call.1} parent=5 // pred_region
        %s103 = ssub.s32 %s11, 1
      $region12: #{tpu_custom_call.1} parent=5 // pred_fallthru
        _
      %p104 = scmp.lt.s32.totalorder %s11, 5
      // Predicated region
      $region13: #{tpu_custom_call.1} parent=5 // pred_check
        %p105 = pneg %p104
      $region14: #{tpu_custom_call.1} parent=5 // pred_check_branch
        %107 = sbr.rel (%p105) target = $region16
      $region15: #{tpu_custom_call.1} parent=5 // pred_region
        // Predicated region
        $region17: #{tpu_custom_call.1} parent=15 // pred_check
          %p108 = pneg %p31
        $region18: #{tpu_custom_call.1} parent=15 // pred_check_branch
          %110 = sbr.rel (%p108) target = $region20
        $region19: #{tpu_custom_call.1} parent=15 // pred_region
          %p111 = scmp.lt.s32.totalorder %s11, 4
          %s112 = scalar_select %p111, %s11, 4
          %s113 = smul.addr %s112, 8
          %s114 = scalar_lea.vmem %s0, %s113
        $region20: #{tpu_custom_call.1} parent=15 // pred_fallthru
          _
        // Predicated region
        $region21: #{tpu_custom_call.1} parent=15 // pred_check
          %p115 = pneg %p57
        $region22: #{tpu_custom_call.1} parent=15 // pred_check_branch
          %117 = sbr.rel (%p115) target = $region24
        $region23: #{tpu_custom_call.1} parent=15 // pred_region
          %p118 = scmp.lt.s32.totalorder %s11, 4
          %s119 = scalar_select %p118, %s11, 4
          %s120 = smul.addr %s119, 8
          %s121 = scalar_lea.vmem %s1, %s120
        $region24: #{tpu_custom_call.1} parent=15 // pred_fallthru
          _
      $region16: #{tpu_custom_call.1} parent=5 // pred_fallthru
        _
      %p122 = scmp.le.s32.totalorder 1, %s11
      %p123 = scmp.lt.s32.totalorder %s11, 6
      %p124 = pnand %p122, %p123
      %p125 = pneg %p124
      // Predicated region
      $region25: #{tpu_custom_call.1} parent=5 // pred_check
        _
      $region26: #{tpu_custom_call.1} parent=5 // pred_check_branch
        %127 = sbr.rel (%p124) target = $region28
      $region27: #{tpu_custom_call.1} parent=5 // pred_region
        %s128 = ssub.s32 %s11, 1
        %p129 = scmp.lt.s32.totalorder %s16, 4
        %s130 = scalar_select %p129, %s16, 4
        %s131 = smul.addr %s130, 8
        %s132 = scalar_lea.vmem %s0, %s131
        %p133 = pneg %p37
        %p134 = pneg %p34
        %p135 = scmp.lt.s32.totalorder %s16, 4
        %s136 = scalar_select %p135, %s16, 4
        %s137 = smul.addr %s136, 8
        %s138 = scalar_lea.vmem %s1, %s137
        %p139 = pneg %p63
        %p140 = pneg %p60
        %p141 = pneg %p89
        %p142 = pneg %p86
        %s143 = sand.u32 %s76, 1
        %s144 = scalar_lea.sflag [#allocation3], %s143
        %s145 = sand.u32 %s76, 1
        %s146 = smul.addr %s145, 8
        %s147 = scalar_lea.vmem [#allocation2], %s146
        %p148 = scmp.lt.s32.totalorder %s16, 4
        %s149 = scalar_select %p148, %s16, 4
        %s150 = smul.addr %s149, 8
        %s151 = scalar_lea.vmem %s0, %s150
        %p152 = scmp.lt.s32.totalorder %s16, 4
        %s153 = scalar_select %p152, %s16, 4
        %s154 = smul.addr %s153, 8
        %s155 = scalar_lea.vmem %s1, %s154
        %v156 = vld [vmem:[%s155] sm:$0xff]
        %v157 = vld [vmem:[%s151] sm:$0xff]
        %159 = vset.pattern.permute.xlu0 0
        %160 = vperm.xlu0 %159, %v157
        %v161 = vpop.permute.xlu0 %160
        %v163 = vmul.f32 %v156, %v161
        %164 = vst [vmem:[%s147] sm:$0xff] %v163
        %s165 = sand.u32 %s76, 1
        %s166 = scalar_lea.sflag [#allocation3], %s165
        %s167 = sand.u32 %s76, 1
        %s168 = smul.addr %s167, 8
        %s169 = scalar_lea.vmem [#allocation2], %s168
        // Predicated region
        $region29: #{tpu_custom_call.1} parent=27 // pred_check
          %p170 = pneg %p86
        $region30: #{tpu_custom_call.1} parent=27 // pred_check_branch
          %172 = sbr.rel (%p170) target = $region32
        $region31: #{tpu_custom_call.1} parent=27 // pred_region
          %s174 = ssub.s32 128, 128
          %175 = vsyncadd %s166, %s174
          %s176 = smul.addr %s16, 128
          %s177 = scalar_lea.hbm %s2, %s176
          %s179 = sshll.u32 %s169, 4
          %s180 = int_to_ptr.vmem [resolvable:$true] %s179
          %182 = dma.vmem_to_hbm [thread:$0]  %s180, 128, %s177, %s166
        $region32: #{tpu_custom_call.1} parent=27 // pred_fallthru
          _
      $region28: #{tpu_custom_call.1} parent=5 // pred_fallthru
        _
      %p183 = scmp.le.s32.totalorder 2, %s11
      // Predicated region
      $region33: #{tpu_custom_call.1} parent=5 // pred_check
        %p184 = pneg %p183
      $region34: #{tpu_custom_call.1} parent=5 // pred_check_branch
        %186 = sbr.rel (%p184) target = $region36
      $region35: #{tpu_custom_call.1} parent=5 // pred_region
        %s187 = ssub.s32 %s11, 2
        // Predicated region
        $region37: #{tpu_custom_call.1} parent=35 // pred_check
          %p188 = pneg %p92
        $region38: #{tpu_custom_call.1} parent=35 // pred_check_branch
          %190 = sbr.rel (%p188) target = $region40
        $region39: #{tpu_custom_call.1} parent=35 // pred_region
          %s191 = sand.u32 %s77, 1
          %s192 = scalar_lea.sflag [#allocation3], %s191
          %s193 = sand.u32 %s77, 1
          %s194 = smul.addr %s193, 8
          %s195 = scalar_lea.vmem [#allocation2], %s194
          %196 = dma.done %s192, 128
        $region40: #{tpu_custom_call.1} parent=35 // pred_fallthru
          _
      $region36: #{tpu_custom_call.1} parent=5 // pred_fallthru
        _
    $region6: #{tpu_custom_call.1} parent=1 // loop_footer
      %s15 = sadd.s32 1, %s11
    $region7: #{tpu_custom_call.1} parent=1 // loop_footer_branch
      %10 = sbr.rel target = $region3
    $region8: #{tpu_custom_call.1} parent=1 // loop_exit
      _
    %197 = vsyncpa [#allocation3], 1
    %s198 = scalar_lea.sflag [#allocation3], 1
    %199 = vsyncpa %s198, 1

</llo_original>
